<compile_context>
chip_gen: v7x
topology: tpu7x:2x2x1
jax: 0.10.0
libtpu: 0.0.40
codegen_flags: <defaults>
</compile_context>

<pallas_src>
import jax
import jax.numpy as jnp
from jax.experimental import pallas as pl
from jax.experimental.pallas import tpu as pltpu


def _round_up(x, m):
    return (x + m - 1) // m * m


def _choose_rows_per_tile(n_rows, tile_rows):
    """Rows (of 128 samples each) per grid step.

    Keeps the block second-to-last dim a multiple of 8 (or the full extent) and
    prefers a grid of >= 2 steps so v7x can use both TensorCores.
    """
    if n_rows <= 8:
        return n_rows  # single tile; block == full extent along this axis
    cap = max(8, _round_up((n_rows + 1) // 2, 8))  # ensure >= 2 grid steps
    rows = min(max(8, tile_rows), cap)
    rows -= rows % 8
    return max(8, rows)


def _mlp_kernel(params_ref, x_ref, o_ref):
    # params_ref : SMEM f32[13] = [w1 (2x4) row-major, b1 (2), w2 (1x2), b2 (1)]
    # x_ref      : VMEM (4, rows, 128)  -- batch rides the (sublane, lane) plane
    # o_ref      : VMEM (rows, 128)
    p = params_ref
    # Hoist all scalar parameter reads; each broadcast vreg is formed once per step.
    w00, w01, w02, w03 = p[0], p[1], p[2], p[3]
    w10, w11, w12, w13 = p[4], p[5], p[6], p[7]
    b10, b11 = p[8], p[9]
    v0, v1, b2 = p[10], p[11], p[12]

    x0 = x_ref[0]
    x1 = x_ref[1]
    x2 = x_ref[2]
    x3 = x_ref[3]

    # fc1 + ReLU: scalar-broadcast multiply-adds on the VPU (no MXU for K=4).
    h0 = jnp.maximum(w00 * x0 + w01 * x1 + w02 * x2 + w03 * x3 + b10, 0.0)
    h1 = jnp.maximum(w10 * x0 + w11 * x1 + w12 * x2 + w13 * x3 + b11, 0.0)

    # fc4 + sigmoid.  exp on the (otherwise idle) EUP; exact reciprocal keeps
    # the 1e-5 tolerance vs. the float reference.
    z = v0 * h0 + v1 * h1 + b2
    e = jnp.exp(-z)
    o_ref[...] = pl.reciprocal(1.0 + e, approx=False).astype(o_ref.dtype)


def mlp_forward(x, w1, b1, w2, b2, *, tile_b=256 * 1024):
    """x: (B, 4); w1: (2, 4); b1: (2,); w2: (1, 2); b2: (1,)  (PyTorch layouts).

    Returns (B, 1).  Internally the batch is laid out feature-major and
    sublane/lane-dense as (4, n_rows, 128); the single wrapper-side transpose of
    x is the only extra HBM pass (output reshape/slice is negligible).
    """
    B, F_in = x.shape
    assert F_in == 4, F_in

    n_rows = _round_up(B, 128) // 128
    rows_blk = _choose_rows_per_tile(n_rows, tile_b // 128)
    n_rows_pad = _round_up(n_rows, rows_blk)
    B_pad = n_rows_pad * 128
    grid = (n_rows_pad // rows_blk,)

    # Layout plumbing (wrapper, not kernel): (B,4) -> (4, n_rows_pad, 128).
    # TODO(synk): if the upstream producer can emit x feature-major (4, B),
    # this transpose (one extra HBM pass over x) disappears entirely.
    x_t = jnp.pad(x.astype(jnp.float32), ((0, B_pad - B), (0, 0))).T
    x_t = x_t.reshape(F_in, n_rows_pad, 128)

    # All 13 parameters in one flat SMEM-resident scalar table.
    params = jnp.concatenate(
        [w1.reshape(-1), b1.reshape(-1), w2.reshape(-1), b2.reshape(-1)]
    ).astype(jnp.float32)

    out = pl.pallas_call(
        _mlp_kernel,
        out_shape=jax.ShapeDtypeStruct((n_rows_pad, 128), x.dtype),
        grid_spec=pltpu.PrefetchScalarGridSpec(
            num_scalar_prefetch=0,
            grid=grid,
            in_specs=[
                pl.BlockSpec(memory_space=pltpu.MemorySpace.SMEM),        # params
                pl.BlockSpec((F_in, rows_blk, 128), lambda i: (0, i, 0)),  # x tile
            ],
            out_specs=pl.BlockSpec((rows_blk, 128), lambda i: (i, 0)),
        ),
        compiler_params=pltpu.CompilerParams(
            dimension_semantics=("parallel",),
        ),
        cost_estimate=pl.CostEstimate(
            flops=14 * B_pad, transcendentals=B_pad, bytes_accessed=20 * B_pad
        ),
    )(params, x_t)

    # (n_rows_pad, 128) row-major == flat batch order; slice off padding.
    return out.reshape(B_pad, 1)[:B]


def init_params(key):
    # Deterministic init mimicking torch.nn.Linear default:
    # U(-1/sqrt(fan_in), 1/sqrt(fan_in)) for both weight and bias, PyTorch shapes.
    k1, k2, k3, k4 = jax.random.split(key, 4)
    bound1 = 1.0 / jnp.sqrt(4.0)
    bound2 = 1.0 / jnp.sqrt(2.0)
    w1 = jax.random.uniform(k1, (2, 4), jnp.float32, -bound1, bound1)  # fc1.weight
    b1 = jax.random.uniform(k2, (2,), jnp.float32, -bound1, bound1)    # fc1.bias
    w2 = jax.random.uniform(k3, (1, 2), jnp.float32, -bound2, bound2)  # fc4.weight
    b2 = jax.random.uniform(k4, (1,), jnp.float32, -bound2, bound2)    # fc4.bias
    return w1, b1, w2, b2


def reference_forward(x, w1, b1, w2, b2):
    h = jnp.maximum(x @ w1.T + b1, 0.0)
    return jax.nn.sigmoid(h @ w2.T + b2)


if __name__ == "__main__":
    key = jax.random.PRNGKey(0)
    kx, kx2, kp = jax.random.split(key, 3)

    w1, b1, w2, b2 = init_params(kp)

    # Small batch (single-tile path).
    batch = 16
    x = jax.random.normal(kx, (batch, 4), jnp.float32)
    out = jax.block_until_ready(mlp_forward(x, w1, b1, w2, b2))
    ref = reference_forward(x, w1, b1, w2, b2)
    assert out.shape == (batch, 1), out.shape
    assert jnp.allclose(out, ref, atol=1e-5, rtol=1e-5), "mismatch vs reference (small)"

    # Slightly larger batch to exercise the multi-tile (grid >= 2) path.
    batch2 = 1536
    x2 = jax.random.normal(kx2, (batch2, 4), jnp.float32)
    out2 = jax.block_until_ready(mlp_forward(x2, w1, b1, w2, b2))
    ref2 = reference_forward(x2, w1, b1, w2, b2)
    assert out2.shape == (batch2, 1), out2.shape
    assert jnp.allclose(out2, ref2, atol=1e-5, rtol=1e-5), "mismatch vs reference (multi-tile)"

    print("KERNEL_OK")
</pallas_src>

<mosaic_0001>
module attributes {stable_mosaic.version = 11 : i64} {
  func.func @_mlp_kernel(%arg0: i32, %arg1: memref<13xf32, #tpu.memory_space<smem>>, %arg2: memref<4x1x128xf32, #tpu.memory_space<vmem>>, %arg3: memref<1x128xf32, #tpu.memory_space<vmem>>) attributes {dimension_semantics = [#tpu.dimension_semantics<parallel>], iteration_bounds = array<i64: 1>, scalar_prefetch = 0 : i64, scratch_operands = 0 : i64, tpu.core_type = #tpu.core_type<tc>, window_params = [{transform_indices = @transform_0, window_bounds = array<i64: 13>}, {transform_indices = @transform_1, window_bounds = array<i64: 4, 1, 128>}, {transform_indices = @transform_2, window_bounds = array<i64: 1, 128>}]} {
    %c0 = arith.constant 0 : index
    %0 = memref.load %arg1[%c0] : memref<13xf32, #tpu.memory_space<smem>>
    %c1 = arith.constant 1 : index
    %1 = memref.load %arg1[%c1] : memref<13xf32, #tpu.memory_space<smem>>
    %c2 = arith.constant 2 : index
    %2 = memref.load %arg1[%c2] : memref<13xf32, #tpu.memory_space<smem>>
    %c3 = arith.constant 3 : index
    %3 = memref.load %arg1[%c3] : memref<13xf32, #tpu.memory_space<smem>>
    %c4 = arith.constant 4 : index
    %4 = memref.load %arg1[%c4] : memref<13xf32, #tpu.memory_space<smem>>
    %c5 = arith.constant 5 : index
    %5 = memref.load %arg1[%c5] : memref<13xf32, #tpu.memory_space<smem>>
    %c6 = arith.constant 6 : index
    %6 = memref.load %arg1[%c6] : memref<13xf32, #tpu.memory_space<smem>>
    %c7 = arith.constant 7 : index
    %7 = memref.load %arg1[%c7] : memref<13xf32, #tpu.memory_space<smem>>
    %c8 = arith.constant 8 : index
    %8 = memref.load %arg1[%c8] : memref<13xf32, #tpu.memory_space<smem>>
    %c9 = arith.constant 9 : index
    %9 = memref.load %arg1[%c9] : memref<13xf32, #tpu.memory_space<smem>>
    %c10 = arith.constant 10 : index
    %10 = memref.load %arg1[%c10] : memref<13xf32, #tpu.memory_space<smem>>
    %c11 = arith.constant 11 : index
    %11 = memref.load %arg1[%c11] : memref<13xf32, #tpu.memory_space<smem>>
    %c12 = arith.constant 12 : index
    %12 = memref.load %arg1[%c12] : memref<13xf32, #tpu.memory_space<smem>>
    %c0_0 = arith.constant 0 : index
    %c0_1 = arith.constant 0 : index
    %c0_2 = arith.constant 0 : index
    %13 = vector.load %arg2[%c0_0, %c0_1, %c0_2] : memref<4x1x128xf32, #tpu.memory_space<vmem>>, vector<1x1x128xf32>
    %14 = vector.shape_cast %13 : vector<1x1x128xf32> to vector<1x128xf32>
    %c1_3 = arith.constant 1 : index
    %c0_4 = arith.constant 0 : index
    %c0_5 = arith.constant 0 : index
    %15 = vector.load %arg2[%c1_3, %c0_4, %c0_5] : memref<4x1x128xf32, #tpu.memory_space<vmem>>, vector<1x1x128xf32>
    %16 = vector.shape_cast %15 : vector<1x1x128xf32> to vector<1x128xf32>
    %c2_6 = arith.constant 2 : index
    %c0_7 = arith.constant 0 : index
    %c0_8 = arith.constant 0 : index
    %17 = vector.load %arg2[%c2_6, %c0_7, %c0_8] : memref<4x1x128xf32, #tpu.memory_space<vmem>>, vector<1x1x128xf32>
    %18 = vector.shape_cast %17 : vector<1x1x128xf32> to vector<1x128xf32>
    %c3_9 = arith.constant 3 : index
    %c0_10 = arith.constant 0 : index
    %c0_11 = arith.constant 0 : index
    %19 = vector.load %arg2[%c3_9, %c0_10, %c0_11] : memref<4x1x128xf32, #tpu.memory_space<vmem>>, vector<1x1x128xf32>
    %20 = vector.shape_cast %19 : vector<1x1x128xf32> to vector<1x128xf32>
    %21 = vector.broadcast %0 : f32 to vector<1x128xf32>
    %22 = arith.mulf %21, %14 : vector<1x128xf32>
    %23 = vector.broadcast %1 : f32 to vector<1x128xf32>
    %24 = arith.mulf %23, %16 : vector<1x128xf32>
    %25 = arith.addf %22, %24 : vector<1x128xf32>
    %26 = vector.broadcast %2 : f32 to vector<1x128xf32>
    %27 = arith.mulf %26, %18 : vector<1x128xf32>
    %28 = arith.addf %25, %27 : vector<1x128xf32>
    %29 = vector.broadcast %3 : f32 to vector<1x128xf32>
    %30 = arith.mulf %29, %20 : vector<1x128xf32>
    %31 = arith.addf %28, %30 : vector<1x128xf32>
    %32 = vector.broadcast %8 : f32 to vector<1x128xf32>
    %33 = arith.addf %31, %32 : vector<1x128xf32>
    %cst = arith.constant 0.000000e+00 : f32
    %34 = vector.broadcast %cst : f32 to vector<1x128xf32>
    %35 = arith.maximumf %33, %34 : vector<1x128xf32>
    %36 = vector.broadcast %4 : f32 to vector<1x128xf32>
    %37 = arith.mulf %36, %14 : vector<1x128xf32>
    %38 = vector.broadcast %5 : f32 to vector<1x128xf32>
    %39 = arith.mulf %38, %16 : vector<1x128xf32>
    %40 = arith.addf %37, %39 : vector<1x128xf32>
    %41 = vector.broadcast %6 : f32 to vector<1x128xf32>
    %42 = arith.mulf %41, %18 : vector<1x128xf32>
    %43 = arith.addf %40, %42 : vector<1x128xf32>
    %44 = vector.broadcast %7 : f32 to vector<1x128xf32>
    %45 = arith.mulf %44, %20 : vector<1x128xf32>
    %46 = arith.addf %43, %45 : vector<1x128xf32>
    %47 = vector.broadcast %9 : f32 to vector<1x128xf32>
    %48 = arith.addf %46, %47 : vector<1x128xf32>
    %cst_12 = arith.constant 0.000000e+00 : f32
    %49 = vector.broadcast %cst_12 : f32 to vector<1x128xf32>
    %50 = arith.maximumf %48, %49 : vector<1x128xf32>
    %51 = vector.broadcast %10 : f32 to vector<1x128xf32>
    %52 = arith.mulf %51, %35 : vector<1x128xf32>
    %53 = vector.broadcast %11 : f32 to vector<1x128xf32>
    %54 = arith.mulf %53, %50 : vector<1x128xf32>
    %55 = arith.addf %52, %54 : vector<1x128xf32>
    %56 = vector.broadcast %12 : f32 to vector<1x128xf32>
    %57 = arith.addf %55, %56 : vector<1x128xf32>
    %cst_13 = arith.constant 0.000000e+00 : f32
    %58 = vector.broadcast %cst_13 : f32 to vector<1x128xf32>
    %59 = arith.subf %58, %57 : vector<1x128xf32>
    %60 = math.exp %59 : vector<1x128xf32>
    %cst_14 = arith.constant 1.000000e+00 : f32
    %61 = vector.broadcast %cst_14 : f32 to vector<1x128xf32>
    %62 = arith.addf %61, %60 : vector<1x128xf32>
    %63 = tpu.reciprocal %62 : vector<1x128xf32> -> vector<1x128xf32>
    %c0_15 = arith.constant 0 : index
    %c0_16 = arith.constant 0 : index
    %64 = vector.load %arg3[%c0_15, %c0_16] : memref<1x128xf32, #tpu.memory_space<vmem>>, vector<1x128xf32>
    tpu.vector_store %arg3[%c0_15, %c0_16], %63 {strides = array<i32>} : memref<1x128xf32, #tpu.memory_space<vmem>>, vector<1x128xf32>,
    return
  }
  func.func @transform_0(%arg0: i32) -> i32 {
    %c0_i32 = arith.constant 0 : i32
    %c0_i32_0 = arith.constant 0 : i32
    return %c0_i32 : i32
  }
  func.func @transform_1(%arg0: i32) -> (i32, i32, i32) {
    %c0_i32 = arith.constant 0 : i32
    %c0_i32_0 = arith.constant 0 : i32
    %c0_i32_1 = arith.constant 0 : i32
    return %c0_i32, %arg0, %c0_i32_0 : i32, i32, i32
  }
  func.func @transform_2(%arg0: i32) -> (i32, i32) {
    %c0_i32 = arith.constant 0 : i32
    %c0_i32_0 = arith.constant 0 : i32
    return %arg0, %c0_i32 : i32, i32
  }
}

</mosaic_0001>

<llo_original>
// kernel: tpu_custom_call.1
$region0: #{tpu_custom_call.1}
  #allocation0 [shape = 'u32[]', space=smem, size = 0x4, offset = 0x4, fixed_abs, tag = 'smem constant byte address 0x4 - core index']
  #allocation1 [shape = 'u32[144,128]{1,0:T(1,128)}', space=vmem, size = 0x12000, scoped, tag = 'internal scratch']
  %s0 = inlined_call_operand.hbm [shape: f32[13], index: 0, kind: input, shape index: {}]
  %s1 = inlined_call_operand.hbm [shape: f32[4,1,128], index: 1, kind: input, shape index: {}]
  %s2 = inlined_call_operand.hbm [shape: f32[1,128], index: 2, kind: output, shape index: {}]
  %s3 = sld [smem:[#allocation0]]
  $region26: #{tpu_custom_call.1} parent=0
    _
  %s5 = ssub.s32 1, %s3
  %s6 = scalar_select 0, %s5, %s3
  $region1: #{tpu_custom_call.1} parent=0
    #allocation2 [shape = 'u8[512]{0}', space=smem, size = 0x200, scoped, tag = 'input window, operand 0, single buffered']
    #allocation3 [shape = 's32[1]{0}', space=sflag, size = 0x4, scoped, tag = 'scoped memory for tpu_custom_call.1']
    #allocation4 [shape = 's32[1]{0}', space=sflag, size = 0x4, scoped, tag = 'scoped memory for tpu_custom_call.1']
    #allocation5 [shape = 's32[1]{0}', space=sflag, size = 0x4, scoped, tag = 'scoped memory for tpu_custom_call.1']
    #allocation6 [shape = 'u8[2048]{0}', space=vmem, size = 0x800, scoped, tag = 'input window, operand 1, single buffered']
    #allocation7 [shape = 'u8[512]{0}', space=vmem, size = 0x400, scoped, tag = 'output window, operand 0, single buffered']
    %7 = vsyncpa [#allocation5], 0
    %8 = vsyncpa [#allocation3], 0
    %9 = vsyncpa [#allocation4], 0
    // Predicated region
    $region2: #{tpu_custom_call.1} parent=1 // pred_check
      _
    $region3: #{tpu_custom_call.1} parent=1 // pred_check_branch
      %11 = sbr.rel (0) target = $region5
    $region4: #{tpu_custom_call.1} parent=1 // pred_region
      %s13 = ssub.s32 16, 16
      %14 = vsyncadd [#allocation5], %s13
      %17 = dma.hbm_to_smem %s0, 16, [#allocation2], [#allocation5]
    $region5: #{tpu_custom_call.1} parent=1 // pred_fallthru
      _
    // Predicated region
    $region6: #{tpu_custom_call.1} parent=1 // pred_check
      _
    $region7: #{tpu_custom_call.1} parent=1 // pred_check_branch
      %19 = sbr.rel (0) target = $region9
    $region8: #{tpu_custom_call.1} parent=1 // pred_region
      %s21 = ssub.s32 64, 64
      %22 = vsyncadd [#allocation3], %s21
      %s23 = sshll.u32 [#allocation6], 4
      %s24 = int_to_ptr.vmem [resolvable:$true] %s23
      %29 = dma.hbm_to_vmem [thread:$0]  %s1, 64, %s24, [#allocation3], 16, 16, 1
    $region9: #{tpu_custom_call.1} parent=1 // pred_fallthru
      _
    // Predicated region
    $region10: #{tpu_custom_call.1} parent=1 // pred_check
      _
    $region11: #{tpu_custom_call.1} parent=1 // pred_check_branch
      %31 = sbr.rel (0) target = $region13
    $region12: #{tpu_custom_call.1} parent=1 // pred_region
      %32 = dma.done [#allocation5], 16
    $region13: #{tpu_custom_call.1} parent=1 // pred_fallthru
      _
    // Predicated region
    $region14: #{tpu_custom_call.1} parent=1 // pred_check
      _
    $region15: #{tpu_custom_call.1} parent=1 // pred_check_branch
      %34 = sbr.rel (0) target = $region17
    $region16: #{tpu_custom_call.1} parent=1 // pred_region
      %35 = dma.done [#allocation3], 64
    $region17: #{tpu_custom_call.1} parent=1 // pred_fallthru
      _
    %36 = sfence
    %s37 = sld [smem:[#allocation2]]
    %s38 = sld [smem:[#allocation2 + $0x1]]
    %s39 = sld [smem:[#allocation2 + $0x2]]
    %s40 = sld [smem:[#allocation2 + $0x3]]
    %s41 = sld [smem:[#allocation2 + $0x4]]
    %s42 = sld [smem:[#allocation2 + $0x5]]
    %s43 = sld [smem:[#allocation2 + $0x6]]
    %s44 = sld [smem:[#allocation2 + $0x7]]
    %s45 = sld [smem:[#allocation2 + $0x8]]
    %s46 = sld [smem:[#allocation2 + $0x9]]
    %s47 = sld [smem:[#allocation2 + $0xa]]
    %s48 = sld [smem:[#allocation2 + $0xb]]
    %s49 = sld [smem:[#allocation2 + $0xc]]
    %v50 = vld [vmem:[#allocation6] sm:$0x1]
    %s51 = scalar_lea.vmem [#allocation6], 1
    %v52 = vld [vmem:[%s51] sm:$0x1]
    %s53 = scalar_lea.vmem [#allocation6], 2
    %v54 = vld [vmem:[%s53] sm:$0x1]
    %s55 = scalar_lea.vmem [#allocation6], 3
    %v56 = vld [vmem:[%s55] sm:$0x1]
    %v57 = vstv %s37
    %v58 = vmul.f32 %v57, %v50
    %v59 = vstv %s38
    %v60 = vmul.f32 %v59, %v52
    %v61 = vadd.f32 %v58, %v60
    %v62 = vstv %s39
    %v63 = vmul.f32 %v62, %v54
    %v64 = vadd.f32 %v61, %v63
    %v65 = vstv %s40
    %v66 = vmul.f32 %v65, %v56
    %v67 = vadd.f32 %v64, %v66
    %v68 = vstv %s45
    %v69 = vadd.f32 %v67, %v68
    %v70 = vmax.f32 %v69, 0.0
    %v71 = vstv %s41
    %v72 = vmul.f32 %v71, %v50
    %v73 = vstv %s42
    %v74 = vmul.f32 %v73, %v52
    %v75 = vadd.f32 %v72, %v74
    %v76 = vstv %s43
    %v77 = vmul.f32 %v76, %v54
    %v78 = vadd.f32 %v75, %v77
    %v79 = vstv %s44
    %v80 = vmul.f32 %v79, %v56
    %v81 = vadd.f32 %v78, %v80
    %v82 = vstv %s46
    %v83 = vadd.f32 %v81, %v82
    %v84 = vmax.f32 %v83, 0.0
    %v85 = vstv %s47
    %v86 = vmul.f32 %v85, %v70
    %v87 = vstv %s48
    %v88 = vmul.f32 %v87, %v84
    %v89 = vadd.f32 %v86, %v88
    %v90 = vstv %s49
    %v91 = vadd.f32 %v89, %v90
    %v92 = vsub.f32 0.0, %v91
    %v93 = vmul.f32 %v92, 1.442695
    %v94 = vpow.pop %v93
    %v95 = vadd.f32 %v94, 1.0
    %v96 = vrcp.pop %v95
    %97 = vst [vmem:[#allocation7] sm:$0x1] %v96
    // Predicated region
    $region18: #{tpu_custom_call.1} parent=1 // pred_check
      _
    $region19: #{tpu_custom_call.1} parent=1 // pred_check_branch
      %99 = sbr.rel (0) target = $region21
    $region20: #{tpu_custom_call.1} parent=1 // pred_region
      %s101 = ssub.s32 16, 16
      %102 = vsyncadd [#allocation4], %s101
      %s104 = sshll.u32 [#allocation7], 4
      %s105 = int_to_ptr.vmem [resolvable:$true] %s104
      %107 = dma.vmem_to_hbm [thread:$0]  %s105, 16, %s2, [#allocation4]
    $region21: #{tpu_custom_call.1} parent=1 // pred_fallthru
      _
    // Predicated region
    $region22: #{tpu_custom_call.1} parent=1 // pred_check
      _
    $region23: #{tpu_custom_call.1} parent=1 // pred_check_branch
      %109 = sbr.rel (0) target = $region25
    $region24: #{tpu_custom_call.1} parent=1 // pred_region
      %110 = dma.done [#allocation4], 16
    $region25: #{tpu_custom_call.1} parent=1 // pred_fallthru
      _
    %111 = vsyncpa [#allocation3], 1
    %112 = vsyncpa [#allocation4], 1
    %113 = vsyncpa [#allocation5], 1

</llo_original>
